<compile_context>
chip_gen: v7x
topology: tpu7x:2x2x1
jax: 0.10.0
libtpu: 0.0.40
codegen_flags: <defaults>
</compile_context>

<pallas_src>
import functools

import jax
import jax.numpy as jnp
from jax import lax
from jax.experimental import pallas as pl
from jax.experimental.pallas import tpu as pltpu


# ---------------------------------------------------------------------------
# Kernel: masked squared-error per-lane partial sums for one (Bt, T, D) tile
# ---------------------------------------------------------------------------
def _masked_sq_kernel(len_ref, x_ref, t_ref, out_ref, *, seq_len_norm):
    # len_ref: (Bt, 1, 1) int32 | x_ref, t_ref: (Bt, T, D) | out_ref: (1, 1, D) f32
    bt, T, D = x_ref.shape

    lens = len_ref[...]                                        # (Bt, 1, 1) int32
    t_idx = lax.broadcasted_iota(jnp.int32, (bt, T, D), 1)     # time index per element
    valid = t_idx < lens                                       # (Bt, T, D) bool

    diff = x_ref[...].astype(jnp.float32) - t_ref[...].astype(jnp.float32)
    sq = jnp.where(valid, diff, 0.0)
    sq = sq * sq                                               # masked squared error

    if seq_len_norm:
        # per-row weight 1/len_b (padded rows have len 0 -> weight 0)
        lens_f = lens.astype(jnp.float32)
        inv_len = jnp.where(lens > 0, 1.0 / jnp.maximum(lens_f, 1.0), 0.0)
        sq = sq * inv_len

    # Per-lane partial sums only (keep D on the lane axis; no cross-lane reduce).
    s = jnp.sum(sq, axis=0)                 # (T, D)
    s = jnp.sum(s, axis=0, keepdims=True)   # (1, D)
    out_ref[0] = s


# ---------------------------------------------------------------------------
# Wrapper
# ---------------------------------------------------------------------------
def _choose_batch_tile(B, T, D, itemsize, vmem_budget_bytes=8 * 1024 * 1024):
    # 2 tensor inputs x 2 pipeline buffers must fit the budget (safe for the 16 MiB
    # default scoped VMEM on v5e and leaves ample headroom on v6e / v7x).
    bytes_per_row = T * D * itemsize
    bt = max(1, vmem_budget_bytes // (4 * bytes_per_row))
    return int(min(bt, B))


def mse_loss_masked(x, target, length, *, seq_len_norm=False):
    """Forward pass of MSELossMasked(seq_len_norm) for x, target: [B, T, D], length: [B]."""
    B, T, D = x.shape
    length = length.astype(jnp.int32)

    bt = _choose_batch_tile(B, T, D, jnp.dtype(x.dtype).itemsize)
    num_tiles = pl.cdiv(B, bt)
    b_pad = num_tiles * bt

    if b_pad != B:
        pad3 = ((0, b_pad - B), (0, 0), (0, 0))
        x = jnp.pad(x, pad3)
        target = jnp.pad(target, pad3)
        length = jnp.pad(length, (0, b_pad - B))   # padded rows: len 0 -> fully masked

    len3 = length.reshape(b_pad, 1, 1)

    partial = pl.pallas_call(
        functools.partial(_masked_sq_kernel, seq_len_norm=seq_len_norm),
        out_shape=jax.ShapeDtypeStruct((num_tiles, 1, D), jnp.float32),
        grid_spec=pltpu.PrefetchScalarGridSpec(
            num_scalar_prefetch=0,
            grid=(num_tiles,),
            in_specs=[
                pl.BlockSpec((bt, 1, 1), lambda i: (i, 0, 0)),
                pl.BlockSpec((bt, T, D), lambda i: (i, 0, 0)),
                pl.BlockSpec((bt, T, D), lambda i: (i, 0, 0)),
            ],
            out_specs=pl.BlockSpec((1, 1, D), lambda i: (i, 0, 0)),
        ),
        compiler_params=pltpu.CompilerParams(
            dimension_semantics=("parallel",),
        ),
    )(len3, x, target)

    total_sq = jnp.sum(partial)  # tiny final reduce in plain JAX

    if seq_len_norm:
        # sum_b [ sum_{t<len_b, d} (x - t)^2 / len_b ] / (B * D)
        return total_sq / jnp.float32(B * D)

    # sum over valid region / mask.sum(), with mask.sum() = D * sum_b len_b (analytic)
    denom = jnp.float32(D) * jnp.sum(length).astype(jnp.float32)
    return total_sq / denom


# ---------------------------------------------------------------------------
# Pure-JAX reference mirroring the PyTorch module
# ---------------------------------------------------------------------------
def _ref_mse_loss_masked(x, target, length, *, seq_len_norm):
    B, T, D = x.shape
    mask = (jnp.arange(T)[None, :] < length[:, None]).astype(jnp.float32)[:, :, None]
    if seq_len_norm:
        norm_w = mask / jnp.sum(mask, axis=1, keepdims=True)
        out_weights = norm_w / (B * D)
        mask_e = jnp.broadcast_to(mask, x.shape)
        loss = (x * mask_e - target * mask_e) ** 2
        return jnp.sum(loss * out_weights)
    mask_e = jnp.broadcast_to(mask, x.shape)
    loss = jnp.sum((x * mask_e - target * mask_e) ** 2)
    return loss / jnp.sum(mask_e)


if __name__ == "__main__":
    key = jax.random.PRNGKey(0)
    B, T, D = 2, 16, 32

    k0, k1 = jax.random.split(key)
    x = jax.random.normal(k0, (B, T, D), jnp.float32)
    target = x + 0.1 * jax.random.normal(k1, (B, T, D), jnp.float32)
    length = jnp.array([16, 12], jnp.int32)

    out_plain = mse_loss_masked(x, target, length, seq_len_norm=False)
    out_norm = mse_loss_masked(x, target, length, seq_len_norm=True)
    jax.block_until_ready((out_plain, out_norm))

    ref_plain = _ref_mse_loss_masked(x, target, length, seq_len_norm=False)
    ref_norm = _ref_mse_loss_masked(x, target, length, seq_len_norm=True)

    assert jnp.allclose(out_plain, ref_plain, rtol=1e-5, atol=1e-6), (out_plain, ref_plain)
    assert jnp.allclose(out_norm, ref_norm, rtol=1e-5, atol=1e-6), (out_norm, ref_norm)
    print("KERNEL_OK")
</pallas_src>

<mosaic_0001>
module attributes {stable_mosaic.version = 11 : i64} {
  func.func @_masked_sq_kernel(%arg0: i32, %arg1: memref<2x1x1xi32, #tpu.memory_space<vmem>>, %arg2: memref<2x16x32xf32, #tpu.memory_space<vmem>>, %arg3: memref<2x16x32xf32, #tpu.memory_space<vmem>>, %arg4: memref<1x1x32xf32, #tpu.memory_space<vmem>>) attributes {dimension_semantics = [#tpu.dimension_semantics<parallel>], iteration_bounds = array<i64: 1>, scalar_prefetch = 0 : i64, scratch_operands = 0 : i64, tpu.core_type = #tpu.core_type<tc>, window_params = [{transform_indices = @transform_0, window_bounds = array<i64: 2, 1, 1>}, {transform_indices = @transform_1, window_bounds = array<i64: 2, 16, 32>}, {transform_indices = @transform_2, window_bounds = array<i64: 2, 16, 32>}, {transform_indices = @transform_3, window_bounds = array<i64: 1, 1, 32>}]} {
    %c0 = arith.constant 0 : index
    %c0_0 = arith.constant 0 : index
    %c0_1 = arith.constant 0 : index
    %0 = vector.load %arg1[%c0, %c0_0, %c0_1] : memref<2x1x1xi32, #tpu.memory_space<vmem>>, vector<2x1x1xi32>
    %1 = tpu.iota {dimensions = array<i32: 1>} : vector<2x16x32xi32>
    %2 = vector.broadcast %0 : vector<2x1x1xi32> to vector<2x16x32xi32>
    %3 = arith.cmpi slt, %1, %2 : vector<2x16x32xi32>
    %c0_2 = arith.constant 0 : index
    %c0_3 = arith.constant 0 : index
    %c0_4 = arith.constant 0 : index
    %4 = vector.load %arg2[%c0_2, %c0_3, %c0_4] : memref<2x16x32xf32, #tpu.memory_space<vmem>>, vector<2x16x32xf32>
    %c0_5 = arith.constant 0 : index
    %c0_6 = arith.constant 0 : index
    %c0_7 = arith.constant 0 : index
    %5 = vector.load %arg3[%c0_5, %c0_6, %c0_7] : memref<2x16x32xf32, #tpu.memory_space<vmem>>, vector<2x16x32xf32>
    %6 = arith.subf %4, %5 : vector<2x16x32xf32>
    %cst = arith.constant 0.000000e+00 : f32
    %7 = vector.broadcast %cst : f32 to vector<2x16x32xf32>
    %8 = arith.select %3, %6, %7 : vector<2x16x32xi1>, vector<2x16x32xf32>
    %9 = arith.mulf %8, %8 : vector<2x16x32xf32>
    %cst_8 = arith.constant dense<0.000000e+00> : vector<16x32xf32>
    %10 = vector.multi_reduction <add>, %9, %cst_8 [0] : vector<2x16x32xf32> to vector<16x32xf32>
    %cst_9 = arith.constant dense<0.000000e+00> : vector<32xf32>
    %11 = vector.multi_reduction <add>, %10, %cst_9 [0] : vector<16x32xf32> to vector<32xf32>
    %12 = vector.shape_cast %11 : vector<32xf32> to vector<1x32xf32>
    %c0_10 = arith.constant 0 : index
    %c0_11 = arith.constant 0 : index
    %c0_12 = arith.constant 0 : index
    %13 = vector.load %arg4[%c0_10, %c0_11, %c0_12] : memref<1x1x32xf32, #tpu.memory_space<vmem>>, vector<1x1x32xf32>
    %14 = vector.shape_cast %13 : vector<1x1x32xf32> to vector<1x32xf32>
    %15 = vector.shape_cast %12 : vector<1x32xf32> to vector<1x1x32xf32>
    tpu.vector_store %arg4[%c0_10, %c0_11, %c0_12], %15 {strides = array<i32>} : memref<1x1x32xf32, #tpu.memory_space<vmem>>, vector<1x1x32xf32>,
    return
  }
  func.func @transform_0(%arg0: i32) -> (i32, i32, i32) {
    %c0_i32 = arith.constant 0 : i32
    %c0_i32_0 = arith.constant 0 : i32
    %c0_i32_1 = arith.constant 0 : i32
    return %arg0, %c0_i32, %c0_i32_0 : i32, i32, i32
  }
  func.func @transform_1(%arg0: i32) -> (i32, i32, i32) {
    %c0_i32 = arith.constant 0 : i32
    %c0_i32_0 = arith.constant 0 : i32
    %c0_i32_1 = arith.constant 0 : i32
    return %arg0, %c0_i32, %c0_i32_0 : i32, i32, i32
  }
  func.func @transform_2(%arg0: i32) -> (i32, i32, i32) {
    %c0_i32 = arith.constant 0 : i32
    %c0_i32_0 = arith.constant 0 : i32
    %c0_i32_1 = arith.constant 0 : i32
    return %arg0, %c0_i32, %c0_i32_0 : i32, i32, i32
  }
  func.func @transform_3(%arg0: i32) -> (i32, i32, i32) {
    %c0_i32 = arith.constant 0 : i32
    %c0_i32_0 = arith.constant 0 : i32
    %c0_i32_1 = arith.constant 0 : i32
    return %arg0, %c0_i32, %c0_i32_0 : i32, i32, i32
  }
}

</mosaic_0001>

<llo_original>
// kernel: tpu_custom_call.1
$region0: #{tpu_custom_call.1}
  #allocation0 [shape = 'u32[]', space=smem, size = 0x4, offset = 0x4, fixed_abs, tag = 'smem constant byte address 0x4 - core index']
  #allocation1 [shape = 'u32[144,128]{1,0:T(1,128)}', space=vmem, size = 0x12000, scoped, tag = 'internal scratch']
  %s0 = inlined_call_operand.vmem [shape: s32[2,1,1], index: 0, kind: input, shape index: {}]
  %s1 = inlined_call_operand.hbm [shape: f32[2,16,32], index: 1, kind: input, shape index: {}]
  %s2 = inlined_call_operand.hbm [shape: f32[2,16,32], index: 2, kind: input, shape index: {}]
  %s3 = inlined_call_operand.hbm [shape: f32[1,1,32], index: 3, kind: output, shape index: {}]
  %s4 = sld [smem:[#allocation0]]
  $region30: #{tpu_custom_call.1} parent=0
    _
  %s6 = ssub.s32 1, %s4
  %s7 = scalar_select 0, %s6, %s4
  $region1: #{tpu_custom_call.1} parent=0
    #allocation2 [shape = 'u8[16384]{0}', space=vmem, size = 0x4000, scoped, tag = 'input window, operand 1, single buffered']
    #allocation3 [shape = 's32[1]{0}', space=sflag, size = 0x4, scoped, tag = 'scoped memory for tpu_custom_call.1']
    #allocation4 [shape = 's32[1]{0}', space=sflag, size = 0x4, scoped, tag = 'scoped memory for tpu_custom_call.1']
    #allocation5 [shape = 'u8[16384]{0}', space=vmem, size = 0x4000, scoped, tag = 'input window, operand 2, single buffered']
    #allocation6 [shape = 's32[1]{0}', space=sflag, size = 0x4, scoped, tag = 'scoped memory for tpu_custom_call.1']
    #allocation7 [shape = 'u8[512]{0}', space=vmem, size = 0x400, scoped, tag = 'output window, operand 0, single buffered']
    %8 = vsyncpa [#allocation3], 0
    %9 = vsyncpa [#allocation6], 0
    %10 = vsyncpa [#allocation4], 0
    // Predicated region
    $region2: #{tpu_custom_call.1} parent=1 // pred_check
      _
    $region3: #{tpu_custom_call.1} parent=1 // pred_check_branch
      %12 = sbr.rel (0) target = $region5
    $region4: #{tpu_custom_call.1} parent=1 // pred_region
      _
    $region5: #{tpu_custom_call.1} parent=1 // pred_fallthru
      _
    // Predicated region
    $region6: #{tpu_custom_call.1} parent=1 // pred_check
      _
    $region7: #{tpu_custom_call.1} parent=1 // pred_check_branch
      %14 = sbr.rel (0) target = $region9
    $region8: #{tpu_custom_call.1} parent=1 // pred_region
      %s16 = ssub.s32 512, 512
      %17 = vsyncadd [#allocation3], %s16
      %s18 = sshll.u32 [#allocation2], 4
      %s19 = int_to_ptr.vmem [resolvable:$true] %s18
      %24 = dma.hbm_to_vmem [thread:$0]  %s1, 512, %s19, [#allocation3], 128, 128, 8
    $region9: #{tpu_custom_call.1} parent=1 // pred_fallthru
      _
    // Predicated region
    $region10: #{tpu_custom_call.1} parent=1 // pred_check
      _
    $region11: #{tpu_custom_call.1} parent=1 // pred_check_branch
      %26 = sbr.rel (0) target = $region13
    $region12: #{tpu_custom_call.1} parent=1 // pred_region
      %s28 = ssub.s32 512, 512
      %29 = vsyncadd [#allocation6], %s28
      %s30 = sshll.u32 [#allocation5], 4
      %s31 = int_to_ptr.vmem [resolvable:$true] %s30
      %36 = dma.hbm_to_vmem [thread:$0]  %s2, 512, %s31, [#allocation6], 128, 128, 8
    $region13: #{tpu_custom_call.1} parent=1 // pred_fallthru
      _
    // Predicated region
    $region14: #{tpu_custom_call.1} parent=1 // pred_check
      _
    $region15: #{tpu_custom_call.1} parent=1 // pred_check_branch
      %38 = sbr.rel (0) target = $region17
    $region16: #{tpu_custom_call.1} parent=1 // pred_region
      %39 = dma.done [#allocation3], 512
    $region17: #{tpu_custom_call.1} parent=1 // pred_fallthru
      _
    // Predicated region
    $region18: #{tpu_custom_call.1} parent=1 // pred_check
      _
    $region19: #{tpu_custom_call.1} parent=1 // pred_check_branch
      %41 = sbr.rel (0) target = $region21
    $region20: #{tpu_custom_call.1} parent=1 // pred_region
      %42 = dma.done [#allocation6], 512
    $region21: #{tpu_custom_call.1} parent=1 // pred_fallthru
      _
    %v43 = vld [vmem:[%s0] sm:$0x1]
    %v44 = vld [vmem:[%s0 + $0x1] sm:$0x1]
    %v45 = vlaneseq
    %v46 = vshrl.u32 %v45, 7
    %v47 = vadd.s32 %v46, 8
    %v48 = vlaneseq
    %v49 = vshrl.u32 %v48, 7
    %v50 = vsub.s32 0, %v49
    %v51 = vrot.slane %v43, %v50
    %v52 = vlaneseq
    %v53 = vshrl.u32 %v52, 7
    %v54 = vsub.s32 0, %v53
    %v55 = vrot.slane %v44, %v54
    %56 = vset.pattern.permute.xlu0 0
    %57 = vperm.xlu0 %56, %v51
    %v58 = vpop.permute.xlu0 %57
    %59 = vset.pattern.permute.xlu0 0
    %60 = vperm.xlu0 %59, %v55
    %v61 = vpop.permute.xlu0 %60
    %vm62 = vcmp.lt.s32.totalorder %v46, %v58
    %vm63 = vcmp.lt.s32.totalorder %v47, %v58
    %vm64 = vcmp.lt.s32.totalorder %v46, %v61
    %vm65 = vcmp.lt.s32.totalorder %v47, %v61
    %v66 = vld [vmem:[#allocation2] sm:$0xff]
    %v67 = vld [vmem:[#allocation2 + $0x8] sm:$0xff]
    %v68 = vld [vmem:[#allocation2 + $0x10] sm:$0xff]
    %v69 = vld [vmem:[#allocation2 + $0x18] sm:$0xff]
    %v70 = vld [vmem:[#allocation5] sm:$0xff]
    %v71 = vld [vmem:[#allocation5 + $0x8] sm:$0xff]
    %v72 = vld [vmem:[#allocation5 + $0x10] sm:$0xff]
    %v73 = vld [vmem:[#allocation5 + $0x18] sm:$0xff]
    %v74 = vsub.f32 %v66, %v70
    %v75 = vsub.f32 %v67, %v71
    %v76 = vsub.f32 %v68, %v72
    %v77 = vsub.f32 %v69, %v73
    %v78 = vsel %vm62, %v74, 0.0
    %v79 = vsel %vm63, %v75, 0.0
    %v80 = vsel %vm64, %v76, 0.0
    %v81 = vsel %vm65, %v77, 0.0
    %v82 = vmul.f32 %v78, %v78
    %v83 = vmul.f32 %v79, %v79
    %v84 = vmul.f32 %v80, %v80
    %v85 = vmul.f32 %v81, %v81
    %vm86 = vcmask 261120
    %v87 = vsel %vm86, %v82, 0.0
    %v88 = vsel %vm86, %v84, 0.0
    %v89 = vadd.f32 %v87, %v88
    %v90 = vsel %vm86, %v83, 0.0
    %v91 = vsel %vm86, %v85, 0.0
    %v92 = vadd.f32 %v90, %v91
    %v93 = vsel %vm86, %v89, 0.0
    %v94 = vsel %vm86, %v92, 0.0
    %v95 = vadd.f32 %v93, %v94
    %v96 = vrot.slane %v95, 4
    %v97 = vadd.f32 %v95, %v96
    %v98 = vrot.slane %v97, 2
    %v99 = vadd.f32 %v97, %v98
    %v100 = vrot.slane %v99, 1
    %v101 = vadd.f32 %v99, %v100
    %vm102 = vcmask 253952
    %103 = vst.msk [vmem:[#allocation7] sm:$0x1] %vm102, %v101
    // Predicated region
    $region22: #{tpu_custom_call.1} parent=1 // pred_check
      _
    $region23: #{tpu_custom_call.1} parent=1 // pred_check_branch
      %105 = sbr.rel (0) target = $region25
    $region24: #{tpu_custom_call.1} parent=1 // pred_region
      %s107 = ssub.s32 16, 16
      %108 = vsyncadd [#allocation4], %s107
      %s110 = sshll.u32 [#allocation7], 4
      %s111 = int_to_ptr.vmem [resolvable:$true] %s110
      %113 = dma.vmem_to_hbm [thread:$0]  %s111, 16, %s3, [#allocation4]
    $region25: #{tpu_custom_call.1} parent=1 // pred_fallthru
      _
    // Predicated region
    $region26: #{tpu_custom_call.1} parent=1 // pred_check
      _
    $region27: #{tpu_custom_call.1} parent=1 // pred_check_branch
      %115 = sbr.rel (0) target = $region29
    $region28: #{tpu_custom_call.1} parent=1 // pred_region
      %116 = dma.done [#allocation4], 16
    $region29: #{tpu_custom_call.1} parent=1 // pred_fallthru
      _
    %117 = vsyncpa [#allocation3], 1
    %118 = vsyncpa [#allocation6], 1
    %119 = vsyncpa [#allocation4], 1

</llo_original>
